<compile_context>
chip_gen: v5e
topology: v5e:2x2
jax: 0.10.0
libtpu: 0.0.40
codegen_flags: <defaults>
</compile_context>

<pallas_src>
import functools

import jax
import jax.numpy as jnp
from jax.experimental import pallas as pl
from jax.experimental.pallas import tpu as pltpu


# ---------------------------------------------------------------------------
# Kernel
# ---------------------------------------------------------------------------
def _layernorm_kernel(x_ref, a_ref, b_ref, o_ref, *, eps, inv_denom):
    """y = a_2 * (x - mean) / (std + eps) + b_2 with unbiased std (N-1)."""
    x = x_ref[...].astype(jnp.float32)                         # (tm, D)
    mean = jnp.mean(x, axis=-1, keepdims=True)                 # (tm, 1)
    centered = x - mean
    var = jnp.sum(centered * centered, axis=-1, keepdims=True) * inv_denom
    d = jnp.sqrt(var) + eps                                    # (tm, 1)
    # EUP approximate reciprocal on the per-row (tm,1) vector + one Newton
    # step (error ~ e^2 -> f32-accurate); avoids a full (tm, D) vdiv on VPU.
    inv = pl.reciprocal(d, approx=True)
    inv = inv * (2.0 - d * inv)
    a = a_ref[...].astype(jnp.float32)                         # (1, D) cast once/tile
    b = b_ref[...].astype(jnp.float32)                         # (1, D)
    o_ref[...] = (centered * (a * inv) + b).astype(o_ref.dtype)
    # TODO(synk): if a v7x profile shows the kernel XLU-bound at D=128, route
    # the two row reductions through the idle MXU (jnp.dot with a ones matrix)
    # instead of cross-lane reduces.


# ---------------------------------------------------------------------------
# Tiling helpers
# ---------------------------------------------------------------------------
def _sublane_multiple(dtype):
    # 8 for 4-byte, 16 for 2-byte, 32 for 1-byte element types.
    return max(8, 32 // max(jnp.dtype(dtype).itemsize, 1))


_VMEM_BLOCK_BUDGET = 24 * 1024 * 1024   # in/out blocks + f32 temps target
_MAX_BLOCK_ROWS = 8192
_MIN_GRID_STEPS = 4                     # keep overlap + megacore sharding


def _choose_block_rows(rows_total, feat, in_itemsize, out_itemsize, sublane):
    """Largest row tile whose blocks + f32 working temps fit the budget."""
    # Double-buffered input + output blocks, plus the f32 working copies
    # (x cast to f32 and `centered`) the kernel keeps live.
    per_row = feat * (2 * in_itemsize + 2 * out_itemsize + 2 * 4)
    blk = _VMEM_BLOCK_BUDGET // max(per_row, 1)
    blk = min(blk, _MAX_BLOCK_ROWS)
    # Keep at least ~_MIN_GRID_STEPS grid steps so DMA/compute overlap and
    # v7x megacore sharding don't degenerate on mid-size inputs.
    blk = min(blk, max(pl.cdiv(rows_total, _MIN_GRID_STEPS), sublane))
    return max((blk // sublane) * sublane, sublane)


# ---------------------------------------------------------------------------
# Wrapper
# ---------------------------------------------------------------------------
def pallas_layernorm(x2d, a_2, b_2, *, eps=1e-6, block_rows=None):
    """x2d: (R, D) with features on the lane (last) axis; a_2, b_2: (D,)."""
    R, D = x2d.shape
    sublane = _sublane_multiple(x2d.dtype)
    if block_rows is None:
        block_rows = _choose_block_rows(
            R, D, x2d.dtype.itemsize, x2d.dtype.itemsize, sublane)

    a2d = a_2.reshape(1, D)
    b2d = b_2.reshape(1, D)
    inv_denom = 1.0 / max(D - 1, 1)        # torch.std: Bessel-corrected (N-1)

    # Non-divisible row counts: cdiv grid; Pallas masks the partial last
    # block's writeback (rows are independent, so tail garbage is harmless).
    grid = (pl.cdiv(R, block_rows),)

    return pl.pallas_call(
        functools.partial(_layernorm_kernel, eps=eps, inv_denom=inv_denom),
        out_shape=jax.ShapeDtypeStruct((R, D), x2d.dtype),
        grid_spec=pltpu.PrefetchScalarGridSpec(
            num_scalar_prefetch=0,
            grid=grid,
            in_specs=[
                pl.BlockSpec((block_rows, D), lambda i: (i, 0)),
                pl.BlockSpec((1, D), lambda i: (0, 0)),
                pl.BlockSpec((1, D), lambda i: (0, 0)),
            ],
            out_specs=pl.BlockSpec((block_rows, D), lambda i: (i, 0)),
        ),
        compiler_params=pltpu.CompilerParams(
            dimension_semantics=("parallel",),      # shards rows across TCs on v7x
            vmem_limit_bytes=48 * 1024 * 1024,      # safe on v5e/v6e/v7x
        ),
    )(x2d, a2d, b2d)


class LayerNormPallas:
    """Pallas port of the custom torch LayerNorm: a_2*(x-mean)/(std+eps)+b_2."""

    def __init__(self, features, eps=1e-6):
        self.features = features
        self.eps = eps
        self.a_2 = jnp.ones((features,), jnp.float32)
        self.b_2 = jnp.zeros((features,), jnp.float32)

    def __call__(self, x):
        *lead, D = x.shape
        assert D == self.features
        rows = 1
        for s in lead:
            rows *= s
        y2d = pallas_layernorm(x.reshape(rows, D), self.a_2, self.b_2,
                               eps=self.eps)
        return y2d.reshape(*lead, D)


# ---------------------------------------------------------------------------
# Pure-JAX reference (torch semantics) for correctness check
# ---------------------------------------------------------------------------
def ref_layernorm(x, a_2, b_2, eps):
    x32 = x.astype(jnp.float32)
    n = x.shape[-1]
    mean = jnp.mean(x32, axis=-1, keepdims=True)
    var = jnp.sum((x32 - mean) ** 2, axis=-1, keepdims=True) / max(n - 1, 1)
    std = jnp.sqrt(var)
    return (a_2 * (x32 - mean) / (std + eps) + b_2).astype(x.dtype)


if __name__ == "__main__":
    key = jax.random.PRNGKey(0)
    kx, ka, kb, ky = jax.random.split(key, 4)

    D = 128  # lane-dense feature dim (multiple of 128) -> unmasked stores
    ln = LayerNormPallas(D)
    # Exercise non-trivial affine params (as if loaded from a checkpoint).
    ln.a_2 = 1.0 + 0.1 * jax.random.normal(ka, (D,), jnp.float32)
    ln.b_2 = 0.1 * jax.random.normal(kb, (D,), jnp.float32)

    # Main case: (batch=2, seq=8, features=128) -> 16 rows, 2 grid steps.
    x = jax.random.normal(kx, (2, 8, D), jnp.float32)
    out = jax.block_until_ready(ln(x))
    exp = ref_layernorm(x, ln.a_2, ln.b_2, ln.eps)
    assert out.shape == x.shape
    assert jnp.allclose(out, exp, atol=1e-4, rtol=1e-4), (
        float(jnp.max(jnp.abs(out - exp))))

    # Ragged case: 21 rows, block_rows=8 -> cdiv grid with a masked tail block.
    x2 = jax.random.normal(ky, (3, 7, D), jnp.float32)
    out2 = jax.block_until_ready(ln(x2))
    exp2 = ref_layernorm(x2, ln.a_2, ln.b_2, ln.eps)
    assert out2.shape == x2.shape
    assert jnp.allclose(out2, exp2, atol=1e-4, rtol=1e-4), (
        float(jnp.max(jnp.abs(out2 - exp2))))

    print("KERNEL_OK")
</pallas_src>

<mosaic_0001>
module attributes {stable_mosaic.version = 11 : i64} {
  func.func @_layernorm_kernel(%arg0: i32, %arg1: memref<8x128xf32, #tpu.memory_space<vmem>>, %arg2: memref<1x128xf32, #tpu.memory_space<vmem>>, %arg3: memref<1x128xf32, #tpu.memory_space<vmem>>, %arg4: memref<8x128xf32, #tpu.memory_space<vmem>>) attributes {dimension_semantics = [#tpu.dimension_semantics<parallel>], iteration_bounds = array<i64: 2>, scalar_prefetch = 0 : i64, scratch_operands = 0 : i64, tpu.core_type = #tpu.core_type<tc>, window_params = [{transform_indices = @transform_0, window_bounds = array<i64: 8, 128>}, {pipeline_mode = #tpu.pipeline_mode<synchronous>, transform_indices = @transform_1, window_bounds = array<i64: 1, 128>}, {pipeline_mode = #tpu.pipeline_mode<synchronous>, transform_indices = @transform_2, window_bounds = array<i64: 1, 128>}, {transform_indices = @transform_3, window_bounds = array<i64: 8, 128>}]} {
    %c0 = arith.constant 0 : index
    %c0_0 = arith.constant 0 : index
    %0 = vector.load %arg1[%c0, %c0_0] : memref<8x128xf32, #tpu.memory_space<vmem>>, vector<8x128xf32>
    %cst = arith.constant dense<0.000000e+00> : vector<8xf32>
    %1 = vector.multi_reduction <add>, %0, %cst [1] : vector<8x128xf32> to vector<8xf32>
    %2 = vector.shape_cast %1 : vector<8xf32> to vector<8x1xf32>
    %cst_1 = arith.constant 1.280000e+02 : f32
    %3 = vector.broadcast %cst_1 : f32 to vector<8x1xf32>
    %4 = arith.divf %2, %3 : vector<8x1xf32>
    %5 = vector.broadcast %4 : vector<8x1xf32> to vector<8x128xf32>
    %6 = arith.subf %0, %5 : vector<8x128xf32>
    %7 = arith.mulf %6, %6 : vector<8x128xf32>
    %cst_2 = arith.constant dense<0.000000e+00> : vector<8xf32>
    %8 = vector.multi_reduction <add>, %7, %cst_2 [1] : vector<8x128xf32> to vector<8xf32>
    %9 = vector.shape_cast %8 : vector<8xf32> to vector<8x1xf32>
    %cst_3 = arith.constant 0.00787401571 : f32
    %10 = vector.broadcast %cst_3 : f32 to vector<8x1xf32>
    %11 = arith.mulf %9, %10 : vector<8x1xf32>
    %12 = math.sqrt %11 : vector<8x1xf32>
    %cst_4 = arith.constant 9.99999997E-7 : f32
    %13 = vector.broadcast %cst_4 : f32 to vector<8x1xf32>
    %14 = arith.addf %12, %13 : vector<8x1xf32>
    %15 = tpu.reciprocal %14 {approx = true} : vector<8x1xf32> -> vector<8x1xf32>
    %16 = arith.mulf %14, %15 : vector<8x1xf32>
    %cst_5 = arith.constant 2.000000e+00 : f32
    %17 = vector.broadcast %cst_5 : f32 to vector<8x1xf32>
    %18 = arith.subf %17, %16 : vector<8x1xf32>
    %19 = arith.mulf %15, %18 : vector<8x1xf32>
    %c0_6 = arith.constant 0 : index
    %c0_7 = arith.constant 0 : index
    %20 = vector.load %arg2[%c0_6, %c0_7] : memref<1x128xf32, #tpu.memory_space<vmem>>, vector<1x128xf32>
    %c0_8 = arith.constant 0 : index
    %c0_9 = arith.constant 0 : index
    %21 = vector.load %arg3[%c0_8, %c0_9] : memref<1x128xf32, #tpu.memory_space<vmem>>, vector<1x128xf32>
    %22 = vector.broadcast %20 : vector<1x128xf32> to vector<8x128xf32>
    %23 = vector.broadcast %19 : vector<8x1xf32> to vector<8x128xf32>
    %24 = arith.mulf %22, %23 : vector<8x128xf32>
    %25 = arith.mulf %6, %24 : vector<8x128xf32>
    %26 = vector.broadcast %21 : vector<1x128xf32> to vector<8x128xf32>
    %27 = arith.addf %25, %26 : vector<8x128xf32>
    %c0_10 = arith.constant 0 : index
    %c0_11 = arith.constant 0 : index
    %28 = vector.load %arg4[%c0_10, %c0_11] : memref<8x128xf32, #tpu.memory_space<vmem>>, vector<8x128xf32>
    tpu.vector_store %arg4[%c0_10, %c0_11], %27 {strides = array<i32>} : memref<8x128xf32, #tpu.memory_space<vmem>>, vector<8x128xf32>,
    return
  }
  func.func @transform_0(%arg0: i32) -> (i32, i32) {
    %c0_i32 = arith.constant 0 : i32
    %c0_i32_0 = arith.constant 0 : i32
    return %arg0, %c0_i32 : i32, i32
  }
  func.func @transform_1(%arg0: i32) -> (i32, i32) {
    %c0_i32 = arith.constant 0 : i32
    %c0_i32_0 = arith.constant 0 : i32
    %c0_i32_1 = arith.constant 0 : i32
    return %c0_i32, %c0_i32_0 : i32, i32
  }
  func.func @transform_2(%arg0: i32) -> (i32, i32) {
    %c0_i32 = arith.constant 0 : i32
    %c0_i32_0 = arith.constant 0 : i32
    %c0_i32_1 = arith.constant 0 : i32
    return %c0_i32, %c0_i32_0 : i32, i32
  }
  func.func @transform_3(%arg0: i32) -> (i32, i32) {
    %c0_i32 = arith.constant 0 : i32
    %c0_i32_0 = arith.constant 0 : i32
    return %arg0, %c0_i32 : i32, i32
  }
}

</mosaic_0001>

<llo_original>
// kernel: tpu_custom_call.1
$region0: #{tpu_custom_call.1}
  #allocation0 [shape = 'u32[]', space=smem, size = 0x4, offset = 0x4, fixed_abs, tag = 'smem constant byte address 0x4 - core index']
  #allocation1 [shape = 'u32[72,128]{1,0:T(1,128)}', space=vmem, size = 0x9000, scoped, tag = 'internal scratch']
  %s0 = inlined_call_operand.hbm [shape: f32[16,128], index: 0, kind: input, shape index: {}]
  %s1 = inlined_call_operand.hbm [shape: f32[1,128], index: 1, kind: input, shape index: {}]
  %s2 = inlined_call_operand.vmem [shape: f32[1,128], index: 2, kind: input, shape index: {}]
  %s3 = inlined_call_operand.hbm [shape: f32[16,128], index: 3, kind: output, shape index: {}]
  %s4 = sld [smem:[#allocation0]]
  $region53: #{tpu_custom_call.1} parent=0
    _
  %s6 = ssub.s32 1, %s4
  %s7 = scalar_select 0, %s6, %s4
  $region1: #{tpu_custom_call.1} parent=0
    #allocation2 [shape = 'u8[8192]{0}', space=vmem, size = 0x2000, scoped, tag = 'input window, operand 0']
    #allocation3 [shape = 's32[2]{0}', space=sflag, size = 0x8, scoped, tag = 'scoped memory for tpu_custom_call.1']
    #allocation4 [shape = 's32[2]{0}', space=sflag, size = 0x8, scoped, tag = 'scoped memory for tpu_custom_call.1']
    #allocation5 [shape = 'u8[512]{0}', space=vmem, size = 0x400, scoped, tag = 'input window, operand 1, single buffered']
    #allocation6 [shape = 's32[1]{0}', space=sflag, size = 0x4, scoped, tag = 'scoped memory for tpu_custom_call.1']
    #allocation7 [shape = 'u8[8192]{0}', space=vmem, size = 0x2000, scoped, tag = 'output window, operand 0']
    %8 = vsyncpa [#allocation3], 0
    %s9 = scalar_lea.sflag [#allocation3], 1
    %10 = vsyncpa %s9, 0
    %11 = vsyncpa [#allocation6], 0
    %12 = vsyncpa [#allocation4], 0
    %s13 = scalar_lea.sflag [#allocation4], 1
    %14 = vsyncpa %s13, 0
    loop: start=0, step=1, limit=4
    $region2: #{tpu_custom_call.1} parent=1 // loop_pre_header
      _
    $region3: #{tpu_custom_call.1} parent=1 // loop_header
      %s16 = sphi 0, %s20
      %p17 = scmp.ge.s32.totalorder %s16, 4
      %s26 = sphi 0, %s28
      %s29 = sphi 0, %s26
      %s30 = sphi 0, %s29
      %s46 = sphi 0, %s30
      %s50 = sphi 0, %s50
      %s52 = sphi 0, %s50
      %s53 = sphi 0, %s52
      %s67 = sphi 0, %s53
      %s71 = sphi 0, %s71
      %s73 = sphi 0, %s71
      %s74 = sphi 0, %s73
      %s88 = sphi 0, %s74
      %s94 = sphi 0, %s96
      %s97 = sphi 0, %s94
      %s98 = sphi 0, %s97
      %s114 = sphi 0, %s98
    $region4: #{tpu_custom_call.1} parent=1 // loop_header_branch
      %19 = sbr.rel (%p17) target = $region8
    $region5: #{tpu_custom_call.1} parent=1 // loop_body
      %s21 = ssub.s32 %s16, 1
      %s22 = ssub.s32 %s16, 2
      %s23 = sadd.s32 %s16, 1
      %s24 = ssub.s32 %s16, %s23
      %p25 = scmp.eq.s32.totalorder %s24, 0
      %s27 = sadd.s32 %s26, 1
      %s28 = scalar_select %p25, %s26, %s27
      %p31 = pneg %p25
      %p32 = scmp.eq.s32.totalorder %s16, 1
      %p33 = por %p31, %p32
      %p34 = scmp.ne.s32.totalorder %s26, %s29
      %p35 = scmp.eq.s32.totalorder %s16, 0
      %p36 = por %p34, %p35
      %p37 = scmp.ne.s32.totalorder %s26, %s29
      %p38 = scmp.eq.s32.totalorder %s21, 1
      %p39 = por %p37, %p38
      %p40 = scmp.ne.s32.totalorder %s29, %s30
      %p41 = scmp.eq.s32.totalorder %s21, 0
      %p42 = por %p40, %p41
      %p43 = scmp.ne.s32.totalorder %s29, %s30
      %p44 = scmp.eq.s32.totalorder %s22, 1
      %p45 = por %p43, %p44
      %p47 = scmp.ne.s32.totalorder %s30, %s46
      %p48 = scmp.eq.s32.totalorder %s22, 0
      %p49 = por %p47, %p48
      %s51 = sadd.s32 %s50, 1
      %p54 = scmp.eq.s32.totalorder %s16, 1
      %p55 = scmp.ne.s32.totalorder %s50, %s52
      %p56 = scmp.eq.s32.totalorder %s16, 0
      %p57 = por %p55, %p56
      %p58 = scmp.ne.s32.totalorder %s50, %s52
      %p59 = scmp.eq.s32.totalorder %s21, 1
      %p60 = por %p58, %p59
      %p61 = scmp.ne.s32.totalorder %s52, %s53
      %p62 = scmp.eq.s32.totalorder %s21, 0
      %p63 = por %p61, %p62
      %p64 = scmp.ne.s32.totalorder %s52, %s53
      %p65 = scmp.eq.s32.totalorder %s22, 1
      %p66 = por %p64, %p65
      %p68 = scmp.ne.s32.totalorder %s53, %s67
      %p69 = scmp.eq.s32.totalorder %s22, 0
      %p70 = por %p68, %p69
      %s72 = sadd.s32 %s71, 1
      %p75 = scmp.eq.s32.totalorder %s16, 1
      %p76 = scmp.ne.s32.totalorder %s71, %s73
      %p77 = scmp.eq.s32.totalorder %s16, 0
      %p78 = por %p76, %p77
      %p79 = scmp.ne.s32.totalorder %s71, %s73
      %p80 = scmp.eq.s32.totalorder %s21, 1
      %p81 = por %p79, %p80
      %p82 = scmp.ne.s32.totalorder %s73, %s74
      %p83 = scmp.eq.s32.totalorder %s21, 0
      %p84 = por %p82, %p83
      %p85 = scmp.ne.s32.totalorder %s73, %s74
      %p86 = scmp.eq.s32.totalorder %s22, 1
      %p87 = por %p85, %p86
      %p89 = scmp.ne.s32.totalorder %s74, %s88
      %p90 = scmp.eq.s32.totalorder %s22, 0
      %p91 = por %p89, %p90
      %s92 = ssub.s32 %s16, %s23
      %p93 = scmp.eq.s32.totalorder %s92, 0
      %s95 = sadd.s32 %s94, 1
      %s96 = scalar_select %p93, %s94, %s95
      %p99 = pneg %p93
      %p100 = scmp.eq.s32.totalorder %s16, 1
      %p101 = por %p99, %p100
      %p102 = scmp.ne.s32.totalorder %s94, %s97
      %p103 = scmp.eq.s32.totalorder %s16, 0
      %p104 = por %p102, %p103
      %p105 = scmp.ne.s32.totalorder %s94, %s97
      %p106 = scmp.eq.s32.totalorder %s21, 1
      %p107 = por %p105, %p106
      %p108 = scmp.ne.s32.totalorder %s97, %s98
      %p109 = scmp.eq.s32.totalorder %s21, 0
      %p110 = por %p108, %p109
      %p111 = scmp.ne.s32.totalorder %s97, %s98
      %p112 = scmp.eq.s32.totalorder %s22, 1
      %p113 = por %p111, %p112
      %p115 = scmp.ne.s32.totalorder %s98, %s114
      %p116 = scmp.eq.s32.totalorder %s22, 0
      %p117 = por %p115, %p116
      %p118 = scmp.le.s32.totalorder 1, %s16
      %p119 = scmp.lt.s32.totalorder %s16, 3
      %p120 = pnand %p118, %p119
      %p121 = pneg %p120
      // Predicated region
      $region9: #{tpu_custom_call.1} parent=5 // pred_check
        _
      $region10: #{tpu_custom_call.1} parent=5 // pred_check_branch
        %123 = sbr.rel (%p120) target = $region12
      $region11: #{tpu_custom_call.1} parent=5 // pred_region
        %s124 = ssub.s32 %s16, 1
        // Predicated region
        $region13: #{tpu_custom_call.1} parent=11 // pred_check
          %p125 = pneg %p63
        $region14: #{tpu_custom_call.1} parent=11 // pred_check_branch
          %127 = sbr.rel (%p125) target = $region16
        $region15: #{tpu_custom_call.1} parent=11 // pred_region
          %129 = vsyncadd [#allocation6], 0
          %s131 = sshll.u32 %s1, 4
          %s132 = int_to_ptr.hbm [resolvable:$true] %s131
          %s133 = sshll.u32 [#allocation5], 4
          %s134 = int_to_ptr.vmem [resolvable:$true] %s133
          %136 = dma.hbm_to_vmem [thread:$0]  %s132, 16, %s134, [#allocation6]
        $region16: #{tpu_custom_call.1} parent=11 // pred_fallthru
          _
        // Predicated region
        $region17: #{tpu_custom_call.1} parent=11 // pred_check
          %p137 = pneg %p84
        $region18: #{tpu_custom_call.1} parent=11 // pred_check_branch
          %139 = sbr.rel (%p137) target = $region20
        $region19: #{tpu_custom_call.1} parent=11 // pred_region
          _
        $region20: #{tpu_custom_call.1} parent=11 // pred_fallthru
          _
      $region12: #{tpu_custom_call.1} parent=5 // pred_fallthru
        _
      %p140 = scmp.lt.s32.totalorder %s16, 2
      // Predicated region
      $region21: #{tpu_custom_call.1} parent=5 // pred_check
        %p141 = pneg %p140
      $region22: #{tpu_custom_call.1} parent=5 // pred_check_branch
        %143 = sbr.rel (%p141) target = $region24
      $region23: #{tpu_custom_call.1} parent=5 // pred_region
        // Predicated region
        $region25: #{tpu_custom_call.1} parent=23 // pred_check
          %p144 = pneg %p36
        $region26: #{tpu_custom_call.1} parent=23 // pred_check_branch
          %146 = sbr.rel (%p144) target = $region28
        $region27: #{tpu_custom_call.1} parent=23 // pred_region
          %s147 = sand.u32 %s26, 1
          %s148 = scalar_lea.sflag [#allocation3], %s147
          %s149 = sand.u32 %s26, 1
          %s150 = smul.addr %s149, 8
          %s151 = scalar_lea.vmem [#allocation2], %s150
          %153 = vsyncadd %s148, 0
          %s154 = smul.addr %s16, 8
          %s155 = scalar_lea.hbm %s0, %s154
          %s157 = sshll.u32 %s155, 4
          %s158 = int_to_ptr.hbm [resolvable:$true] %s157
          %s159 = sshll.u32 %s151, 4
          %s160 = int_to_ptr.vmem [resolvable:$true] %s159
          %162 = dma.hbm_to_vmem [thread:$0]  %s158, 128, %s160, %s148
        $region28: #{tpu_custom_call.1} parent=23 // pred_fallthru
          _
      $region24: #{tpu_custom_call.1} parent=5 // pred_fallthru
        _
      %p163 = scmp.le.s32.totalorder 1, %s16
      %p164 = scmp.lt.s32.totalorder %s16, 3
      %p165 = pnand %p163, %p164
      %p166 = pneg %p165
      // Predicated region
      $region29: #{tpu_custom_call.1} parent=5 // pred_check
        _
      $region30: #{tpu_custom_call.1} parent=5 // pred_check_branch
        %168 = sbr.rel (%p165) target = $region32
      $region31: #{tpu_custom_call.1} parent=5 // pred_region
        %s169 = ssub.s32 %s16, 1
        %s170 = sand.u32 %s29, 1
        %s171 = scalar_lea.sflag [#allocation3], %s170
        %s172 = sand.u32 %s29, 1
        %s173 = smul.addr %s172, 8
        %s174 = scalar_lea.vmem [#allocation2], %s173
        // Predicated region
        $region33: #{tpu_custom_call.1} parent=31 // pred_check
          %p175 = pneg %p42
        $region34: #{tpu_custom_call.1} parent=31 // pred_check_branch
          %177 = sbr.rel (%p175) target = $region36
        $region35: #{tpu_custom_call.1} parent=31 // pred_region
          %179 = dma.done %s171, 128
        $region36: #{tpu_custom_call.1} parent=31 // pred_fallthru
          _
        // Predicated region
        $region37: #{tpu_custom_call.1} parent=31 // pred_check
          %p180 = pneg %p63
        $region38: #{tpu_custom_call.1} parent=31 // pred_check_branch
          %182 = sbr.rel (%p180) target = $region40
        $region39: #{tpu_custom_call.1} parent=31 // pred_region
          %184 = dma.done [#allocation6], 16
        $region40: #{tpu_custom_call.1} parent=31 // pred_fallthru
          _
        %s185 = sand.u32 %s29, 1
        %s186 = scalar_lea.sflag [#allocation3], %s185
        %s187 = sand.u32 %s29, 1
        %s188 = smul.addr %s187, 8
        %s189 = scalar_lea.vmem [#allocation2], %s188
        %p190 = pneg %p42
        %p191 = pneg %p39
        %p192 = pneg %p63
        %p193 = pneg %p60
        %p194 = pneg %p84
        %p195 = pneg %p81
        %p196 = pneg %p110
        %p197 = pneg %p107
        %s198 = sand.u32 %s97, 1
        %s199 = scalar_lea.sflag [#allocation4], %s198
        %s200 = sand.u32 %s97, 1
        %s201 = smul.addr %s200, 8
        %s202 = scalar_lea.vmem [#allocation7], %s201
        %v203 = vld [vmem:[%s174] sm:$0xff]
        %204 = vadd.xlane.f32.xlu0 %v203
        %v205 = vpop.xlane.xlu0 %204
        %v206 = vrcp.pop 128.0
        %v207 = vmul.f32 128.0, %v206
        %v208 = vsub.f32 1.0, %v207
        %v209 = vmul.f32 %v206, %v208
        %v210 = vadd.f32 %v206, %v209
        %vm211 = vweird.f32 %v206
        %v212 = vsel %vm211, %v206, %v210
        %v213 = vmul.f32 %v205, %v212
        %v214 = vsub.f32 %v203, %v213
        %v215 = vmul.f32 %v214, %v214
        %216 = vadd.xlane.f32.xlu0 %v215
        %v217 = vpop.xlane.xlu0 %216
        %v218 = vmul.f32 %v217, 0.007874016
        %v219 = vrsqrt.pop %v218
        %v220 = vmul.f32 %v219, %v218
        %v221 = vmul.f32 %v220, %v219
        %v222 = vmul.f32 0.5, %v221
        %v223 = vsub.f32 1.5, %v222
        %v224 = vmul.f32 %v219, %v223
        %v225 = vmul.f32 %v218, %v224
        %vm226 = vcmp.eq.f32.partialorder %v218, inf
        %v227 = vsel %vm226, %v218, %v225
        %vm228 = vcmp.eq.f32.partialorder %v218, 0.0
        %v229 = vand.u32 %v218, 2147483648
        %v230 = vsel %vm228, %v229, %v227
        %v231 = vadd.f32 %v230, 1e-06
        %v232 = vrcp.pop %v231
        %v233 = vmul.f32 %v231, %v232
        %v234 = vsub.f32 2.0, %v233
        %v235 = vmul.f32 %v232, %v234
        %v236 = vld [vmem:[#allocation5] sm:$0x1]
        %v237 = vld [vmem:[%s2] sm:$0x1]
        %v239 = vperm.slane %v236, 0
        %v241 = vmul.f32 %v239, %v235
        %v242 = vmul.f32 %v214, %v241
        %v244 = vperm.slane %v237, 0
        %v246 = vadd.f32 %v242, %v244
        %247 = vst [vmem:[%s202] sm:$0xff] %v246
        %s248 = sand.u32 %s97, 1
        %s249 = scalar_lea.sflag [#allocation4], %s248
        %s250 = sand.u32 %s97, 1
        %s251 = smul.addr %s250, 8
        %s252 = scalar_lea.vmem [#allocation7], %s251
        // Predicated region
        $region41: #{tpu_custom_call.1} parent=31 // pred_check
          %p253 = pneg %p107
        $region42: #{tpu_custom_call.1} parent=31 // pred_check_branch
          %255 = sbr.rel (%p253) target = $region44
        $region43: #{tpu_custom_call.1} parent=31 // pred_region
          %257 = vsyncadd %s249, 0
          %s258 = smul.addr %s21, 8
          %s259 = scalar_lea.hbm %s3, %s258
          %s261 = sshll.u32 %s252, 4
          %s262 = int_to_ptr.vmem [resolvable:$true] %s261
          %s263 = sshll.u32 %s259, 4
          %s264 = int_to_ptr.hbm [resolvable:$true] %s263
          %266 = dma.vmem_to_hbm [thread:$0]  %s262, 128, %s264, %s249
        $region44: #{tpu_custom_call.1} parent=31 // pred_fallthru
          _
      $region32: #{tpu_custom_call.1} parent=5 // pred_fallthru
        _
      %p267 = scmp.le.s32.totalorder 2, %s16
      // Predicated region
      $region45: #{tpu_custom_call.1} parent=5 // pred_check
        %p268 = pneg %p267
      $region46: #{tpu_custom_call.1} parent=5 // pred_check_branch
        %270 = sbr.rel (%p268) target = $region48
      $region47: #{tpu_custom_call.1} parent=5 // pred_region
        %s271 = ssub.s32 %s16, 2
        // Predicated region
        $region49: #{tpu_custom_call.1} parent=47 // pred_check
          %p272 = pneg %p113
        $region50: #{tpu_custom_call.1} parent=47 // pred_check_branch
          %274 = sbr.rel (%p272) target = $region52
        $region51: #{tpu_custom_call.1} parent=47 // pred_region
          %s275 = sand.u32 %s98, 1
          %s276 = scalar_lea.sflag [#allocation4], %s275
          %s277 = sand.u32 %s98, 1
          %s278 = smul.addr %s277, 8
          %s279 = scalar_lea.vmem [#allocation7], %s278
          %281 = dma.done %s276, 128
        $region52: #{tpu_custom_call.1} parent=47 // pred_fallthru
          _
      $region48: #{tpu_custom_call.1} parent=5 // pred_fallthru
        _
    $region6: #{tpu_custom_call.1} parent=1 // loop_footer
      %s20 = sadd.s32 1, %s16
    $region7: #{tpu_custom_call.1} parent=1 // loop_footer_branch
      %15 = sbr.rel target = $region3
    $region8: #{tpu_custom_call.1} parent=1 // loop_exit
      _
    %282 = vsyncpa [#allocation3], 1
    %s283 = scalar_lea.sflag [#allocation3], 1
    %284 = vsyncpa %s283, 1
    %285 = vsyncpa [#allocation6], 1
    %286 = vsyncpa [#allocation4], 1
    %s287 = scalar_lea.sflag [#allocation4], 1
    %288 = vsyncpa %s287, 1

</llo_original>
